<compile_context>
chip_gen: v6e
topology: v6e:2x2x1
jax: 0.10.0
libtpu: 0.0.40
codegen_flags: <defaults>
</compile_context>

<pallas_src>
import functools

import jax
import jax.numpy as jnp
import numpy as np
from jax.experimental import pallas as pl
from jax.experimental.pallas import tpu as pltpu

# ----------------------- model hyper-parameters (args) -----------------------
N_ATOM_FEATS = 16
N_BOND_FEATS = 8
N_FBOND_FEATS = N_ATOM_FEATS + N_BOND_FEATS
HIDDEN_SIZE = 32
DEPTH = 3
N_CLASSES = 1
SHARE_EMBED = False   # separate src / tgt GraphConv weights
OUT_PAD = 128         # lane-padded width of the head output slab
MOL_PAD = 8           # sublane-padded number of output rows (unmasked vst)
ROW_ALIGN = 16        # bf16 sublane tile is (16, 128): align slab sections


# ------------------------------- Pallas kernel --------------------------------
def _fused_rxn_kernel(lay, g_ref, w_ref, b_ref, out_ref):
    """Whole RxnPredictor forward; 3 input slabs, everything resident in VMEM."""
    f32, bf16 = jnp.float32, jnp.bfloat16
    H, H2, F2 = HIDDEN_SIZE, 2 * HIDDEN_SIZE, 2 * N_FBOND_FEATS
    nb, na, nm, fat_w = lay["nb"], lay["na"], lay["nm"], lay["fat_w"]

    # ---- carve the graph slab (static slices -> zero-cost windows) ----
    fbonds = g_ref[lay["g_fbonds"]:lay["g_fbonds"] + nb, 0:F2]     # (nb, 2F)
    a_bond = g_ref[lay["g_abond"]:lay["g_abond"] + nb, 0:nb]       # (nb, nb)
    a_atom = g_ref[lay["g_aatom"]:lay["g_aatom"] + na, 0:nb]       # (na, nb)
    fat    = g_ref[lay["g_fat"]:lay["g_fat"] + na, 0:fat_w]        # (na, 2A+2)
    scope  = g_ref[lay["g_scope"]:lay["g_scope"] + nm, 0:na]       # (nm, na)

    # ---- carve the weight slab ----
    w_i   = w_ref[lay["w_i"]:lay["w_i"] + F2, 0:H2]                # (2F, 2H)
    w_h   = w_ref[lay["w_h"]:lay["w_h"] + H2, 0:H2]                # (2H, 2H)
    w_o_f = w_ref[lay["w_o_f"]:lay["w_o_f"] + fat_w, 0:H2]         # (2A+2, 2H)
    w_o_m = w_ref[lay["w_o_m"]:lay["w_o_m"] + H2, 0:H2]            # (2H, 2H)
    w_rh  = w_ref[lay["w_rh"]:lay["w_rh"] + H2, 0:H]               # (2H, H) = [-Wrh; Wrh]
    w_ro  = w_ref[lay["w_ro"]:lay["w_ro"] + H, 0:OUT_PAD]          # (H, 128)

    b_rh = b_ref[0:1, 0:H]                                         # f32
    b_ro = b_ref[1:2, 0:OUT_PAD]                                   # f32

    # ---- merged src+tgt GraphConv (lane-block-diagonal structure) ----
    # W_message_i(fbonds): bf16 x bf16 -> f32 accumulation on the MXU.
    nei_input_h = jnp.dot(fbonds, w_i, preferred_element_type=f32)  # (nb, 2H)
    message_h = jnp.maximum(nei_input_h, 0.0)

    # depth - 1 message-passing steps (Python int -> statically unrolled).
    for _ in range(DEPTH - 1):
        # index_select(bgraph).sum(dim=1) == A_bond @ message_h
        nei = jnp.dot(a_bond, message_h.astype(bf16), preferred_element_type=f32)
        nei = jnp.dot(nei.astype(bf16), w_h, preferred_element_type=f32)
        message_h = jnp.maximum(nei_input_h + nei, 0.0)

    # index_select(agraph).sum(dim=1) == A_atom @ message_h
    nei_atom = jnp.dot(a_atom, message_h.astype(bf16), preferred_element_type=f32)
    # cat([fatoms, nei]) @ W_o + b_o  (bias folded into w_o_f via indicator cols)
    atom_h = jnp.maximum(
        jnp.dot(fat, w_o_f, preferred_element_type=f32)
        + jnp.dot(nei_atom.astype(bf16), w_o_m, preferred_element_type=f32),
        0.0)                                                        # (na, 2H)

    # Per-reaction aggregation: lanes [0,H) = src mol sum, [H,2H) = tgt mol sum.
    mol_h = jnp.dot(scope, atom_h.astype(bf16), preferred_element_type=f32)

    # Reaction head: (tgt - src) @ W_rh folded into one dot against [-Wrh; Wrh].
    rxn_h = jnp.maximum(
        jnp.dot(mol_h.astype(bf16), w_rh, preferred_element_type=f32) + b_rh,
        0.0)
    out_ref[...] = (jnp.dot(rxn_h.astype(bf16), w_ro, preferred_element_type=f32)
                    + b_ro)


# ------------------------------ kernel wrapper ---------------------------------
_VMEM = pl.BlockSpec(memory_space=pltpu.MemorySpace.VMEM)


def rxn_predictor_forward(g_slab, w_slab, b_slab, layout):
    """Full RxnPredictor forward pass as ONE fused Pallas kernel call."""
    out_pad = pl.pallas_call(
        functools.partial(_fused_rxn_kernel, layout),
        out_shape=jax.ShapeDtypeStruct((layout["nm"], OUT_PAD), jnp.float32),
        in_specs=[_VMEM, _VMEM, _VMEM],
        out_specs=_VMEM,
    )(g_slab, w_slab, b_slab)
    return out_pad[:layout["n_mols"], :N_CLASSES]


# ------------------------------ input / weight packing --------------------------
def _align(n, a=ROW_ALIGN):
    return -(-n // a) * a


def _block_diag(a, b):
    out = np.zeros((a.shape[0] + b.shape[0], a.shape[1] + b.shape[1]), np.float32)
    out[:a.shape[0], :a.shape[1]] = a
    out[a.shape[0]:, a.shape[1]:] = b
    return out


def _pack_rows(blocks, lane_width, dtype):
    """Stack 2-D blocks into one (rows, lane_width) slab; section starts 16-aligned."""
    offs, row = [], 0
    for blk in blocks:
        offs.append(row)
        row = _align(row + blk.shape[0])
    slab = np.zeros((row, lane_width), np.float32)
    for off, blk in zip(offs, blocks):
        slab[off:off + blk.shape[0], :blk.shape[1]] = blk
    return jnp.asarray(slab, dtype), offs


def pack_inputs(src_graph, tgt_graph, params, n_mols):
    """Build the 3 kernel slabs (graph bf16, weights bf16, biases f32) + layout."""
    A, F, H = N_ATOM_FEATS, N_FBOND_FEATS, HIDDEN_SIZE
    f = lambda x: np.asarray(x, np.float32)

    nb_s, nb_t = src_graph["fbonds"].shape[0], tgt_graph["fbonds"].shape[0]
    na_s, na_t = src_graph["fatoms"].shape[0], tgt_graph["fatoms"].shape[0]
    nb, na = nb_s + nb_t, na_s + na_t
    nm = MOL_PAD
    fat_w = 2 * A + 2   # [fatoms_src | fatoms_tgt | src bias ind. | tgt bias ind.]

    # --- graph slab (bf16: counts/one-hots exact, features already bf16) ---
    fbonds_bd = np.zeros((nb, 2 * F), np.float32)
    fbonds_bd[:nb_s, :F] = f(src_graph["fbonds"])
    fbonds_bd[nb_s:, F:] = f(tgt_graph["fbonds"])

    a_bond_bd = _block_diag(f(src_graph["a_bond"]), f(tgt_graph["a_bond"]))
    a_atom_bd = _block_diag(f(src_graph["a_atom"]), f(tgt_graph["a_atom"]))

    fat_slab = np.zeros((na, fat_w), np.float32)
    fat_slab[:na_s, :A] = f(src_graph["fatoms"])
    fat_slab[na_s:, A:2 * A] = f(tgt_graph["fatoms"])
    fat_slab[:na_s, 2 * A] = 1.0       # src bias indicator column
    fat_slab[na_s:, 2 * A + 1] = 1.0   # tgt bias indicator column

    scope = np.zeros((nm, na), np.float32)
    scope[:n_mols, :na_s] = f(src_graph["scope_mat"])
    scope[:n_mols, na_s:] = f(tgt_graph["scope_mat"])

    gw = max(2 * F, nb, fat_w, na)
    g_slab, g_offs = _pack_rows(
        [fbonds_bd, a_bond_bd, a_atom_bd, fat_slab, scope], gw, jnp.bfloat16)

    # --- weight slab (bf16, 128 lanes, lane/row block-diagonal per graph) ---
    sp, tp, hp = params["src_conv"], params["tgt_conv"], params["head"]
    w_i_bd = _block_diag(f(sp["w_i"]), f(tp["w_i"]))       # (2F, 2H)
    w_h_bd = _block_diag(f(sp["w_h"]), f(tp["w_h"]))       # (2H, 2H)
    w_o_f = np.zeros((fat_w, 2 * H), np.float32)           # fatoms + bias rows of W_o
    w_o_f[:A, :H] = f(sp["w_o_a"])
    w_o_f[A:2 * A, H:] = f(tp["w_o_a"])
    w_o_f[2 * A, :H] = f(sp["b_o"]).reshape(-1)
    w_o_f[2 * A + 1, H:] = f(tp["b_o"]).reshape(-1)
    w_o_m = _block_diag(f(sp["w_o_m"]), f(tp["w_o_m"]))    # (2H, 2H)
    w_rh_c = np.concatenate([-f(hp["w_rh"]), f(hp["w_rh"])], axis=0)   # (2H, H)
    w_ro_p = np.zeros((H, OUT_PAD), np.float32)
    w_ro_p[:, :N_CLASSES] = f(hp["w_ro"])

    w_slab, w_offs = _pack_rows(
        [w_i_bd, w_h_bd, w_o_f, w_o_m, w_rh_c, w_ro_p], OUT_PAD, jnp.bfloat16)

    # --- bias slab (f32) ---
    b_slab = np.zeros((2, OUT_PAD), np.float32)
    b_slab[0, :H] = f(hp["b_rh"]).reshape(-1)
    b_slab[1, :N_CLASSES] = f(hp["b_ro"]).reshape(-1)
    b_slab = jnp.asarray(b_slab, jnp.float32)

    layout = {
        "nb": nb, "na": na, "nm": nm, "fat_w": fat_w, "n_mols": n_mols,
        "g_fbonds": g_offs[0], "g_abond": g_offs[1], "g_aatom": g_offs[2],
        "g_fat": g_offs[3], "g_scope": g_offs[4],
        "w_i": w_offs[0], "w_h": w_offs[1], "w_o_f": w_offs[2],
        "w_o_m": w_offs[3], "w_rh": w_offs[4], "w_ro": w_offs[5],
    }
    return g_slab, w_slab, b_slab, layout


# ------------------------------ pure-JAX reference -----------------------------
# Mirrors the kernel's bf16-at-MXU-input / f32-accumulate numerics (documented
# deviation from a pure-f32 PyTorch forward, within ~bf16 rounding).
def _graphconv_ref(g, p, depth):
    f32, bf16 = jnp.float32, jnp.bfloat16
    nei_input_h = jnp.dot(g["fbonds"], p["w_i"], preferred_element_type=f32)
    message_h = jnp.maximum(nei_input_h, 0.0)
    for _ in range(depth - 1):
        nei = jnp.dot(g["a_bond"], message_h.astype(bf16), preferred_element_type=f32)
        nei = jnp.dot(nei.astype(bf16), p["w_h"], preferred_element_type=f32)
        message_h = jnp.maximum(nei_input_h + nei, 0.0)
    nei = jnp.dot(g["a_atom"], message_h.astype(bf16), preferred_element_type=f32)
    atom_h = (jnp.dot(g["fatoms"], p["w_o_a"], preferred_element_type=f32)
              + jnp.dot(nei.astype(bf16), p["w_o_m"], preferred_element_type=f32)
              + p["b_o"].astype(f32))
    return jnp.maximum(atom_h, 0.0)


def rxn_predictor_ref(src_graph, tgt_graph, params):
    f32, bf16 = jnp.float32, jnp.bfloat16
    a_src = _graphconv_ref(src_graph, params["src_conv"], DEPTH)
    a_tgt = _graphconv_ref(tgt_graph, params["tgt_conv"], DEPTH)
    src_mol = jnp.dot(src_graph["scope_mat"], a_src.astype(bf16),
                      preferred_element_type=f32)
    tgt_mol = jnp.dot(tgt_graph["scope_mat"], a_tgt.astype(bf16),
                      preferred_element_type=f32)
    hp = params["head"]
    rxn = (jnp.dot(tgt_mol.astype(bf16), hp["w_rh"], preferred_element_type=f32)
           - jnp.dot(src_mol.astype(bf16), hp["w_rh"], preferred_element_type=f32)
           + hp["b_rh"].astype(f32))
    rxn_h = jnp.maximum(rxn, 0.0)
    return (jnp.dot(rxn_h.astype(bf16), hp["w_ro"], preferred_element_type=f32)
            + hp["b_ro"].astype(f32))


# --------------------------------- setup helpers -------------------------------
def _indices_to_adjacency(idx, n_cols):
    """A[i, k] = count of k in idx[i, :]; (A @ X)[i] == sum_j X[idx[i, j]].

    Counts are small integers -> exact in bf16."""
    onehot = jax.nn.one_hot(idx, n_cols, dtype=jnp.float32)
    return onehot.sum(axis=1).astype(jnp.bfloat16)


def _scope_to_matrix(scope, n_atoms):
    """scope = [(start, length), ...] -> one-hot S (n_mols, n_atoms), exact in bf16."""
    s = np.zeros((len(scope), n_atoms), dtype=np.float32)
    for m, (st, le) in enumerate(scope):
        s[m, st:st + le] = 1.0
    return jnp.asarray(s, dtype=jnp.bfloat16)


def _init_graphconv_params(key):
    k1, k2, k3, k4 = jax.random.split(key, 4)
    bf16 = jnp.bfloat16
    fan_i = N_FBOND_FEATS
    fan_o = N_ATOM_FEATS + HIDDEN_SIZE
    # nn.Linear weights stored transposed (in, out) so kernels compute x @ W.
    w_i = (jax.random.normal(k1, (fan_i, HIDDEN_SIZE), jnp.float32)
           / np.sqrt(fan_i)).astype(bf16)
    w_h = (jax.random.normal(k2, (HIDDEN_SIZE, HIDDEN_SIZE), jnp.float32)
           / np.sqrt(HIDDEN_SIZE)).astype(bf16)
    w_o = (jax.random.normal(k3, (fan_o, HIDDEN_SIZE), jnp.float32)
           / np.sqrt(fan_o)).astype(bf16)
    b_o = (jax.random.normal(k4, (1, HIDDEN_SIZE), jnp.float32) * 0.01).astype(bf16)
    return {"w_i": w_i, "w_h": w_h,
            "w_o_a": w_o[:N_ATOM_FEATS], "w_o_m": w_o[N_ATOM_FEATS:], "b_o": b_o}


def _init_head_params(key):
    k1, k2, k3, k4 = jax.random.split(key, 4)
    bf16 = jnp.bfloat16
    w_rh = (jax.random.normal(k1, (HIDDEN_SIZE, HIDDEN_SIZE), jnp.float32)
            / np.sqrt(HIDDEN_SIZE)).astype(bf16)
    b_rh = jax.random.normal(k2, (1, HIDDEN_SIZE), jnp.float32) * 0.01
    w_ro = (jax.random.normal(k3, (HIDDEN_SIZE, N_CLASSES), jnp.float32)
            / np.sqrt(HIDDEN_SIZE)).astype(bf16)
    b_ro = jax.random.normal(k4, (1, N_CLASSES), jnp.float32) * 0.01
    return {"w_rh": w_rh, "b_rh": b_rh, "w_ro": w_ro, "b_ro": b_ro}


def _make_graph_batch(key, n_atoms, n_bonds, max_nei, scope):
    k1, k2, k3, k4 = jax.random.split(key, 4)
    fatoms = jax.random.normal(k1, (n_atoms, N_ATOM_FEATS),
                               jnp.float32).astype(jnp.bfloat16)
    fbonds = jax.random.normal(k2, (n_bonds, N_FBOND_FEATS),
                               jnp.float32).astype(jnp.bfloat16)
    agraph = jax.random.randint(k3, (n_atoms, max_nei), 0, n_bonds)   # atom -> bonds
    bgraph = jax.random.randint(k4, (n_bonds, max_nei), 0, n_bonds)   # bond -> bonds
    return {
        "fatoms": fatoms,
        "fbonds": fbonds,
        "a_atom": _indices_to_adjacency(agraph, n_bonds),
        "a_bond": _indices_to_adjacency(bgraph, n_bonds),
        "scope_mat": _scope_to_matrix(scope, n_atoms),
    }


# -------------------------------------- main -----------------------------------
if __name__ == "__main__":
    key = jax.random.PRNGKey(0)
    k_src, k_tgt, k_psrc, k_ptgt, k_head = jax.random.split(key, 5)

    # Two reactions (n_mols = 2); src and tgt graph batches.
    n_mols = 2
    src_graph = _make_graph_batch(k_src, n_atoms=10, n_bonds=20, max_nei=4,
                                  scope=[(0, 5), (5, 5)])
    tgt_graph = _make_graph_batch(k_tgt, n_atoms=12, n_bonds=24, max_nei=4,
                                  scope=[(0, 7), (7, 5)])

    src_conv_params = _init_graphconv_params(k_psrc)
    tgt_conv_params = src_conv_params if SHARE_EMBED else _init_graphconv_params(k_ptgt)
    params = {"src_conv": src_conv_params,
              "tgt_conv": tgt_conv_params,
              "head": _init_head_params(k_head)}

    # Host-side (one-time) packing into 3 slabs; kernel carves them with
    # static slices.
    g_slab, w_slab, b_slab, layout = pack_inputs(src_graph, tgt_graph, params,
                                                 n_mols)

    out = rxn_predictor_forward(g_slab, w_slab, b_slab, layout)
    out = jax.block_until_ready(out)

    ref = rxn_predictor_ref(src_graph, tgt_graph, params)
    np.testing.assert_allclose(np.asarray(out), np.asarray(ref),
                               rtol=2e-3, atol=2e-3)

    assert out.shape == (n_mols, N_CLASSES)
    print("KERNEL_OK")
</pallas_src>

<mosaic_0001>
module attributes {stable_mosaic.version = 11 : i64} {
  func.func @_fused_rxn_kernel(%arg0: memref<176x48xbf16, #tpu.memory_space<vmem>>, %arg1: memref<320x128xbf16, #tpu.memory_space<vmem>>, %arg2: memref<2x128xf32, #tpu.memory_space<vmem>>, %arg3: memref<8x128xf32, #tpu.memory_space<vmem>>) attributes {dimension_semantics = [], scalar_prefetch = 0 : i64, scratch_operands = 0 : i64, tpu.core_type = #tpu.core_type<tc>} {
    %c0 = arith.constant 0 : index
    %c0_0 = arith.constant 0 : index
    %0 = vector.load %arg0[%c0, %c0_0] : memref<176x48xbf16, #tpu.memory_space<vmem>>, vector<44x48xbf16>
    %c48 = arith.constant 48 : index
    %c0_1 = arith.constant 0 : index
    %1 = vector.load %arg0[%c48, %c0_1] : memref<176x48xbf16, #tpu.memory_space<vmem>>, vector<44x44xbf16>
    %c96 = arith.constant 96 : index
    %c0_2 = arith.constant 0 : index
    %2 = vector.load %arg0[%c96, %c0_2] : memref<176x48xbf16, #tpu.memory_space<vmem>>, vector<22x44xbf16>
    %c128 = arith.constant 128 : index
    %c0_3 = arith.constant 0 : index
    %3 = vector.load %arg0[%c128, %c0_3] : memref<176x48xbf16, #tpu.memory_space<vmem>>, vector<22x34xbf16>
    %c160 = arith.constant 160 : index
    %c0_4 = arith.constant 0 : index
    %4 = vector.load %arg0[%c160, %c0_4] : memref<176x48xbf16, #tpu.memory_space<vmem>>, vector<8x22xbf16>
    %c0_5 = arith.constant 0 : index
    %c0_6 = arith.constant 0 : index
    %5 = vector.load %arg1[%c0_5, %c0_6] : memref<320x128xbf16, #tpu.memory_space<vmem>>, vector<48x64xbf16>
    %c48_7 = arith.constant 48 : index
    %c0_8 = arith.constant 0 : index
    %6 = vector.load %arg1[%c48_7, %c0_8] : memref<320x128xbf16, #tpu.memory_space<vmem>>, vector<64x64xbf16>
    %c112 = arith.constant 112 : index
    %c0_9 = arith.constant 0 : index
    %7 = vector.load %arg1[%c112, %c0_9] : memref<320x128xbf16, #tpu.memory_space<vmem>>, vector<34x64xbf16>
    %c160_10 = arith.constant 160 : index
    %c0_11 = arith.constant 0 : index
    %8 = vector.load %arg1[%c160_10, %c0_11] : memref<320x128xbf16, #tpu.memory_space<vmem>>, vector<64x64xbf16>
    %c224 = arith.constant 224 : index
    %c0_12 = arith.constant 0 : index
    %9 = vector.load %arg1[%c224, %c0_12] : memref<320x128xbf16, #tpu.memory_space<vmem>>, vector<64x32xbf16>
    %c288 = arith.constant 288 : index
    %c0_13 = arith.constant 0 : index
    %10 = vector.load %arg1[%c288, %c0_13] : memref<320x128xbf16, #tpu.memory_space<vmem>>, vector<32x128xbf16>
    %c0_14 = arith.constant 0 : index
    %c0_15 = arith.constant 0 : index
    %11 = vector.load %arg2[%c0_14, %c0_15] : memref<2x128xf32, #tpu.memory_space<vmem>>, vector<1x32xf32>
    %c1 = arith.constant 1 : index
    %c0_16 = arith.constant 0 : index
    %12 = vector.load %arg2[%c1, %c0_16] : memref<2x128xf32, #tpu.memory_space<vmem>>, vector<1x128xf32>
    %cst = arith.constant dense<0.000000e+00> : vector<44x64xf32>
    %13 = tpu.matmul %0, %5, %cst {dimension_numbers = #tpu.dot_dimension_numbers<[1], [0], [0], [1], [0, 0, 1, 1], [], []>} : vector<44x48xbf16>, vector<48x64xbf16>, vector<44x64xf32> -> vector<44x64xf32>
    %cst_17 = arith.constant 0.000000e+00 : f32
    %14 = vector.broadcast %cst_17 : f32 to vector<44x64xf32>
    %15 = arith.maximumf %13, %14 : vector<44x64xf32>
    %16 = arith.truncf %15 : vector<44x64xf32> to vector<44x64xbf16>
    %cst_18 = arith.constant dense<0.000000e+00> : vector<44x64xf32>
    %17 = tpu.matmul %1, %16, %cst_18 {dimension_numbers = #tpu.dot_dimension_numbers<[1], [0], [0], [1], [0, 0, 1, 1], [], []>} : vector<44x44xbf16>, vector<44x64xbf16>, vector<44x64xf32> -> vector<44x64xf32>
    %18 = arith.truncf %17 : vector<44x64xf32> to vector<44x64xbf16>
    %cst_19 = arith.constant dense<0.000000e+00> : vector<44x64xf32>
    %19 = tpu.matmul %18, %6, %cst_19 {dimension_numbers = #tpu.dot_dimension_numbers<[1], [0], [0], [1], [0, 0, 1, 1], [], []>} : vector<44x64xbf16>, vector<64x64xbf16>, vector<44x64xf32> -> vector<44x64xf32>
    %20 = arith.addf %13, %19 : vector<44x64xf32>
    %cst_20 = arith.constant 0.000000e+00 : f32
    %21 = vector.broadcast %cst_20 : f32 to vector<44x64xf32>
    %22 = arith.maximumf %20, %21 : vector<44x64xf32>
    %23 = arith.truncf %22 : vector<44x64xf32> to vector<44x64xbf16>
    %cst_21 = arith.constant dense<0.000000e+00> : vector<44x64xf32>
    %24 = tpu.matmul %1, %23, %cst_21 {dimension_numbers = #tpu.dot_dimension_numbers<[1], [0], [0], [1], [0, 0, 1, 1], [], []>} : vector<44x44xbf16>, vector<44x64xbf16>, vector<44x64xf32> -> vector<44x64xf32>
    %25 = arith.truncf %24 : vector<44x64xf32> to vector<44x64xbf16>
    %cst_22 = arith.constant dense<0.000000e+00> : vector<44x64xf32>
    %26 = tpu.matmul %25, %6, %cst_22 {dimension_numbers = #tpu.dot_dimension_numbers<[1], [0], [0], [1], [0, 0, 1, 1], [], []>} : vector<44x64xbf16>, vector<64x64xbf16>, vector<44x64xf32> -> vector<44x64xf32>
    %27 = arith.addf %13, %26 : vector<44x64xf32>
    %cst_23 = arith.constant 0.000000e+00 : f32
    %28 = vector.broadcast %cst_23 : f32 to vector<44x64xf32>
    %29 = arith.maximumf %27, %28 : vector<44x64xf32>
    %30 = arith.truncf %29 : vector<44x64xf32> to vector<44x64xbf16>
    %cst_24 = arith.constant dense<0.000000e+00> : vector<22x64xf32>
    %31 = tpu.matmul %2, %30, %cst_24 {dimension_numbers = #tpu.dot_dimension_numbers<[1], [0], [0], [1], [0, 0, 1, 1], [], []>} : vector<22x44xbf16>, vector<44x64xbf16>, vector<22x64xf32> -> vector<22x64xf32>
    %cst_25 = arith.constant dense<0.000000e+00> : vector<22x64xf32>
    %32 = tpu.matmul %3, %7, %cst_25 {dimension_numbers = #tpu.dot_dimension_numbers<[1], [0], [0], [1], [0, 0, 1, 1], [], []>} : vector<22x34xbf16>, vector<34x64xbf16>, vector<22x64xf32> -> vector<22x64xf32>
    %33 = arith.truncf %31 : vector<22x64xf32> to vector<22x64xbf16>
    %cst_26 = arith.constant dense<0.000000e+00> : vector<22x64xf32>
    %34 = tpu.matmul %33, %8, %cst_26 {dimension_numbers = #tpu.dot_dimension_numbers<[1], [0], [0], [1], [0, 0, 1, 1], [], []>} : vector<22x64xbf16>, vector<64x64xbf16>, vector<22x64xf32> -> vector<22x64xf32>
    %35 = arith.addf %32, %34 : vector<22x64xf32>
    %cst_27 = arith.constant 0.000000e+00 : f32
    %36 = vector.broadcast %cst_27 : f32 to vector<22x64xf32>
    %37 = arith.maximumf %35, %36 : vector<22x64xf32>
    %38 = arith.truncf %37 : vector<22x64xf32> to vector<22x64xbf16>
    %cst_28 = arith.constant dense<0.000000e+00> : vector<8x64xf32>
    %39 = tpu.matmul %4, %38, %cst_28 {dimension_numbers = #tpu.dot_dimension_numbers<[1], [0], [0], [1], [0, 0, 1, 1], [], []>} : vector<8x22xbf16>, vector<22x64xbf16>, vector<8x64xf32> -> vector<8x64xf32>
    %40 = arith.truncf %39 : vector<8x64xf32> to vector<8x64xbf16>
    %cst_29 = arith.constant dense<0.000000e+00> : vector<8x32xf32>
    %41 = tpu.matmul %40, %9, %cst_29 {dimension_numbers = #tpu.dot_dimension_numbers<[1], [0], [0], [1], [0, 0, 1, 1], [], []>} : vector<8x64xbf16>, vector<64x32xbf16>, vector<8x32xf32> -> vector<8x32xf32>
    %42 = vector.broadcast %11 : vector<1x32xf32> to vector<8x32xf32>
    %43 = arith.addf %41, %42 : vector<8x32xf32>
    %cst_30 = arith.constant 0.000000e+00 : f32
    %44 = vector.broadcast %cst_30 : f32 to vector<8x32xf32>
    %45 = arith.maximumf %43, %44 : vector<8x32xf32>
    %46 = arith.truncf %45 : vector<8x32xf32> to vector<8x32xbf16>
    %cst_31 = arith.constant dense<0.000000e+00> : vector<8x128xf32>
    %47 = tpu.matmul %46, %10, %cst_31 {dimension_numbers = #tpu.dot_dimension_numbers<[1], [0], [0], [1], [0, 0, 1, 1], [], []>} : vector<8x32xbf16>, vector<32x128xbf16>, vector<8x128xf32> -> vector<8x128xf32>
    %48 = vector.broadcast %12 : vector<1x128xf32> to vector<8x128xf32>
    %49 = arith.addf %47, %48 : vector<8x128xf32>
    %c0_32 = arith.constant 0 : index
    %c0_33 = arith.constant 0 : index
    %50 = vector.load %arg3[%c0_32, %c0_33] : memref<8x128xf32, #tpu.memory_space<vmem>>, vector<8x128xf32>
    tpu.vector_store %arg3[%c0_32, %c0_33], %49 {strides = array<i32>} : memref<8x128xf32, #tpu.memory_space<vmem>>, vector<8x128xf32>,
    return
  }
}

</mosaic_0001>

<llo_original>
// kernel: tpu_custom_call.1
$region0: #{tpu_custom_call.1}
  #allocation0 [shape = 'u32[]', space=smem, size = 0x4, offset = 0x4, fixed_abs, tag = 'smem constant byte address 0x4 - core index']
  #allocation1 [shape = 'u32[144,128]{1,0:T(1,128)}', space=vmem, size = 0x12000, scoped, tag = 'internal scratch']
  %s0 = inlined_call_operand.vmem [shape: bf16[176,48], index: 0, kind: input, shape index: {}]
  %s1 = inlined_call_operand.hbm [shape: bf16[320,128], index: 1, kind: input, shape index: {}]
  %s2 = inlined_call_operand.vmem [shape: f32[2,128], index: 2, kind: input, shape index: {}]
  %s3 = inlined_call_operand.hbm [shape: f32[8,128], index: 3, kind: output, shape index: {}]
  %s4 = sld [smem:[#allocation0]]
  $region26: #{tpu_custom_call.1} parent=0
    _
  %s6 = ssub.s32 1, %s4
  %s7 = scalar_select 0, %s6, %s4
  $region1: #{tpu_custom_call.1} parent=0
    #allocation2 [shape = 'u8[81920]{0}', space=vmem, size = 0x14000, scoped, tag = 'input window, operand 1, single buffered']
    #allocation3 [shape = 's32[1]{0}', space=sflag, size = 0x4, scoped, tag = 'scoped memory for tpu_custom_call.1']
    #allocation4 [shape = 's32[1]{0}', space=sflag, size = 0x4, scoped, tag = 'scoped memory for tpu_custom_call.1']
    #allocation5 [shape = 'u8[4096]{0}', space=vmem, size = 0x1000, scoped, tag = 'output window, operand 0, single buffered']
    %8 = vsyncpa [#allocation3], 0
    %9 = vsyncpa [#allocation4], 0
    // Predicated region
    $region2: #{tpu_custom_call.1} parent=1 // pred_check
      _
    $region3: #{tpu_custom_call.1} parent=1 // pred_check_branch
      %11 = sbr.rel (0) target = $region5
    $region4: #{tpu_custom_call.1} parent=1 // pred_region
      _
    $region5: #{tpu_custom_call.1} parent=1 // pred_fallthru
      _
    // Predicated region
    $region6: #{tpu_custom_call.1} parent=1 // pred_check
      _
    $region7: #{tpu_custom_call.1} parent=1 // pred_check_branch
      %13 = sbr.rel (0) target = $region9
    $region8: #{tpu_custom_call.1} parent=1 // pred_region
      %s15 = ssub.s32 2560, 2560
      %16 = vsyncadd [#allocation3], %s15
      %s17 = sshll.u32 [#allocation2], 4
      %s18 = int_to_ptr.vmem [resolvable:$true] %s17
      %23 = dma.hbm_to_vmem [thread:$0]  %s1, 2560, %s18, [#allocation3], 64, 64, 4
    $region9: #{tpu_custom_call.1} parent=1 // pred_fallthru
      _
    // Predicated region
    $region10: #{tpu_custom_call.1} parent=1 // pred_check
      _
    $region11: #{tpu_custom_call.1} parent=1 // pred_check_branch
      %25 = sbr.rel (0) target = $region13
    $region12: #{tpu_custom_call.1} parent=1 // pred_region
      _
    $region13: #{tpu_custom_call.1} parent=1 // pred_fallthru
      _
    // Predicated region
    $region14: #{tpu_custom_call.1} parent=1 // pred_check
      _
    $region15: #{tpu_custom_call.1} parent=1 // pred_check_branch
      %27 = sbr.rel (0) target = $region17
    $region16: #{tpu_custom_call.1} parent=1 // pred_region
      %28 = dma.done [#allocation3], 2560
    $region17: #{tpu_custom_call.1} parent=1 // pred_fallthru
      _
    %v30 = vld [vmem:[%s0] sm:$0xf]
    %v31 = vld [vmem:[%s0 + $0x4] sm:$0xf]
    %v32 = vld [vmem:[%s0 + $0x8] sm:$0xf]
    %v33 = vld [vmem:[%s0 + $0xc] sm:$0xf]
    %v34 = vld [vmem:[%s0 + $0x10] sm:$0xf]
    %v35 = vld [vmem:[%s0 + $0x14] sm:$0x3]
    %v36 = vld [vmem:[%s0 + $0x18] sm:$0xf]
    %v37 = vld [vmem:[%s0 + $0x1c] sm:$0xf]
    %v38 = vld [vmem:[%s0 + $0x20] sm:$0xf]
    %v39 = vld [vmem:[%s0 + $0x24] sm:$0xf]
    %v40 = vld [vmem:[%s0 + $0x28] sm:$0xf]
    %v41 = vld [vmem:[%s0 + $0x2c] sm:$0x3]
    %v42 = vld [vmem:[%s0 + $0x30] sm:$0xf]
    %v43 = vld [vmem:[%s0 + $0x34] sm:$0xf]
    %v44 = vld [vmem:[%s0 + $0x38] sm:$0x7]
    %v45 = vld [vmem:[%s0 + $0x40] sm:$0xf]
    %v46 = vld [vmem:[%s0 + $0x44] sm:$0xf]
    %v47 = vld [vmem:[%s0 + $0x48] sm:$0x7]
    %v48 = vld [vmem:[%s0 + $0x50] sm:$0xf]
    %v49 = vld [vmem:[#allocation2] sm:$0xf]
    %v50 = vld [vmem:[#allocation2 + $0x4] sm:$0xf]
    %v51 = vld [vmem:[#allocation2 + $0x8] sm:$0xf]
    %v52 = vld [vmem:[#allocation2 + $0xc] sm:$0xf]
    %v53 = vld [vmem:[#allocation2 + $0x10] sm:$0xf]
    %v54 = vld [vmem:[#allocation2 + $0x14] sm:$0xf]
    %v55 = vld [vmem:[#allocation2 + $0x18] sm:$0xf]
    %v56 = vld [vmem:[#allocation2 + $0x1c] sm:$0xf]
    %v57 = vld [vmem:[#allocation2 + $0x20] sm:$0xf]
    %v58 = vld [vmem:[#allocation2 + $0x24] sm:$0xf]
    %v59 = vld [vmem:[#allocation2 + $0x28] sm:$0xf]
    %v60 = vld [vmem:[#allocation2 + $0x2c] sm:$0xf]
    %v61 = vld [vmem:[#allocation2 + $0x30] sm:$0xf]
    %v62 = vld [vmem:[#allocation2 + $0x34] sm:$0xf]
    %v63 = vld [vmem:[#allocation2 + $0x38] sm:$0xf]
    %v64 = vld [vmem:[#allocation2 + $0x3c] sm:$0xf]
    %v65 = vld [vmem:[#allocation2 + $0x40] sm:$0xf]
    %v66 = vld [vmem:[#allocation2 + $0x44] sm:$0xf]
    %v67 = vld [vmem:[#allocation2 + $0x48] sm:$0x1]
    %v68 = vld [vmem:[#allocation2 + $0x50] sm:$0xf]
    %v69 = vld [vmem:[#allocation2 + $0x54] sm:$0xf]
    %v70 = vld [vmem:[#allocation2 + $0x58] sm:$0xf]
    %v71 = vld [vmem:[#allocation2 + $0x5c] sm:$0xf]
    %v72 = vld [vmem:[#allocation2 + $0x60] sm:$0xf]
    %v73 = vld [vmem:[#allocation2 + $0x64] sm:$0xf]
    %v74 = vld [vmem:[#allocation2 + $0x68] sm:$0xf]
    %v75 = vld [vmem:[#allocation2 + $0x6c] sm:$0xf]
    %v76 = vld [vmem:[#allocation2 + $0x70] sm:$0xf]
    %v77 = vld [vmem:[#allocation2 + $0x74] sm:$0xf]
    %v78 = vld [vmem:[#allocation2 + $0x78] sm:$0xf]
    %v79 = vld [vmem:[#allocation2 + $0x7c] sm:$0xf]
    %v80 = vld [vmem:[#allocation2 + $0x80] sm:$0xf]
    %v81 = vld [vmem:[#allocation2 + $0x84] sm:$0xf]
    %v82 = vld [vmem:[#allocation2 + $0x88] sm:$0xf]
    %v83 = vld [vmem:[#allocation2 + $0x8c] sm:$0xf]
    %v84 = vld [vmem:[#allocation2 + $0x90] sm:$0xf]
    %v85 = vld [vmem:[#allocation2 + $0x94] sm:$0xf]
    %v86 = vld [vmem:[#allocation2 + $0x98] sm:$0xf]
    %v87 = vld [vmem:[#allocation2 + $0x9c] sm:$0xf]
    %v88 = vld [vmem:[%s2] sm:$0x1]
    %v89 = vld [vmem:[%s2 + $0x1] sm:$0x1]
    %v96 = vunpack.c.l.b16 %v30
    %v97 = vunpack.c.l.b16 %v31
    %v98 = vunpack.c.l.b16 %v32
    %v99 = vunpack.c.l.b16 %v33
    %v100 = vunpack.c.l.b16 %v34
    %v101 = vunpack.c.l.b16 %v35
    %v102 = vpack.c.b16 %v97, %v96
    %v103 = vpack.c.b16 %v99, %v98
    %v104 = vpack.c.b16 %v101, %v100
    %v111 = vunpack.c.l.b16 %v49
    %v112 = vunpack.c.l.b16 %v50
    %v113 = vunpack.c.l.b16 %v51
    %v114 = vunpack.c.l.b16 %v52
    %v115 = vunpack.c.l.b16 %v53
    %v116 = vunpack.c.l.b16 %v54
    %v117 = vpack.c.b16 %v112, %v111
    %v118 = vpack.c.b16 %v114, %v113
    %v119 = vpack.c.b16 %v116, %v115
    %vm123 = vcmask 392192
    %v125 = vsel %vm123, %v102, 0
    %v128 = vsel %vm123, %v103, 0
    %v131 = vsel %vm123, %v104, 0
    %133 = vmatprep.subr.bf16.mxu0 0
    %134 = vmatpush1.bf16.msra.mxu0 0
    %135 = vmatprep.subr.bf16.mxu0 0
    %136 = vmatpush1.bf16.msra.mxu0 0
    %137 = vmatprep.subr.bf16.mxu0 0
    %138 = vmatpush1.bf16.msra.mxu0 0
    %139 = vmatprep.subr.bf16.mxu0 0
    %140 = vmatpush1.bf16.msra.mxu0 0
    %141 = vmatprep.subr.bf16.mxu0 0
    %142 = vmatpush1.bf16.msra.mxu0 0
    %143 = vmatprep.subr.bf16.mxu0 0
    %144 = vmatpush1.bf16.msra.mxu0 %v119
    %145 = vmatprep.subr.bf16.mxu0 0
    %146 = vmatpush1.bf16.msra.mxu0 %v118
    %147 = vmatprep.subr.bf16.mxu0 0
    %148 = vmatpush1.bf16.msra.mxu0 %v117
    %149 = vmatprep.subr.bf16.mxu0 0
    %150 = vmatpush2.bf16.msra.mxu0 0
    %151 = vmatprep.subr.bf16.mxu0 0
    %152 = vmatpush2.bf16.msra.mxu0 0
    %153 = vmatprep.subr.bf16.mxu0 0
    %154 = vmatpush2.bf16.msra.mxu0 0
    %155 = vmatprep.subr.bf16.mxu0 0
    %156 = vmatpush2.bf16.msra.mxu0 0
    %157 = vmatprep.subr.bf16.mxu0 0
    %158 = vmatpush2.bf16.msra.mxu0 0
    %159 = vmatprep.subr.bf16.mxu0 0
    %160 = vmatpush2.bf16.msra.mxu0 0
    %161 = vmatprep.subr.bf16.mxu0 0
    %162 = vmatpush2.bf16.msra.mxu0 0
    %163 = vmatprep.subr.bf16.mxu0 0
    %164 = vmatpush2.bf16.msra.mxu0 0
    %165 = vmatprep.mubr.bf16.mxu0 0
    %166 = vmatmul.mubr.bf16.gmra.mxu0 %v125
    %v167 = vpop.f32.mrf.mxu0
    %v168 = vadd.f32 0.0, %v167
    %v169 = vpop.f32.mrf.mxu0
    %v170 = vpop.f32.mrf.mxu0
    %v171 = vadd.f32 0.0, %v170
    %v172 = vpop.f32.mrf.mxu0
    %173 = vmatprep.mubr.bf16.mxu0 0
    %174 = vmatmul.mubr.bf16.gmra.mxu0 %v128
    %v175 = vpop.f32.mrf.mxu0
    %v176 = vadd.f32 0.0, %v175
    %v177 = vpop.f32.mrf.mxu0
    %v178 = vpop.f32.mrf.mxu0
    %v179 = vadd.f32 0.0, %v178
    %v180 = vpop.f32.mrf.mxu0
    %181 = vmatprep.mubr.bf16.mxu0 0
    %182 = vmatmul.mubr.bf16.gmra.mxu0 %v131
    %v183 = vpop.f32.mrf.mxu0
    %v184 = vadd.f32 0.0, %v183
    %v185 = vpop.f32.mrf.mxu0
    %v186 = vpop.f32.mrf.mxu0
    %v187 = vadd.f32 0.0, %v186
    %v188 = vpop.f32.mrf.mxu0
    %189 = vdwg.mxu0
    %v190 = vmax.f32 %v168, 0.0
    %v191 = vmax.f32 %v171, 0.0
    %v192 = vmax.f32 %v176, 0.0
    %v193 = vmax.f32 %v179, 0.0
    %v194 = vmax.f32 %v184, 0.0
    %v195 = vmax.f32 %v187, 0.0
    %v196 = vpack.c.bf16 %v191, %v190
    %v197 = vpack.c.bf16 %v193, %v192
    %v198 = vpack.c.bf16 %v195, %v194
    %v205 = vunpack.c.l.b16 %v36
    %v206 = vunpack.c.l.b16 %v37
    %v207 = vunpack.c.l.b16 %v38
    %v208 = vunpack.c.l.b16 %v39
    %v209 = vunpack.c.l.b16 %v40
    %v210 = vunpack.c.l.b16 %v41
    %v211 = vpack.c.b16 %v206, %v205
    %v212 = vpack.c.b16 %v208, %v207
    %v213 = vpack.c.b16 %v210, %v209
    %vm214 = vcmask 359424
    %v216 = vsel %vm214, %v211, 0
    %v219 = vsel %vm214, %v212, 0
    %v222 = vsel %vm214, %v213, 0
    %vm224 = vcmask 1045504
    %v226 = vsel %vm224, %v198, 0
    %228 = vmatprep.subr.bf16.mxu0 0
    %229 = vmatpush1.bf16.msra.mxu0 0
    %230 = vmatprep.subr.bf16.mxu0 0
    %231 = vmatpush1.bf16.msra.mxu0 0
    %232 = vmatprep.subr.bf16.mxu0 0
    %233 = vmatpush1.bf16.msra.mxu0 0
    %234 = vmatprep.subr.bf16.mxu0 0
    %235 = vmatpush1.bf16.msra.mxu0 0
    %236 = vmatprep.subr.bf16.mxu0 0
    %237 = vmatpush1.bf16.msra.mxu0 0
    %238 = vmatprep.subr.bf16.mxu0 0
    %239 = vmatpush1.bf16.msra.mxu0 %v226
    %240 = vmatprep.subr.bf16.mxu0 0
    %241 = vmatpush1.bf16.msra.mxu0 %v197
    %242 = vmatprep.subr.bf16.mxu0 0
    %243 = vmatpush1.bf16.msra.mxu0 %v196
    %244 = vmatprep.subr.bf16.mxu0 0
    %245 = vmatpush2.bf16.msra.mxu0 0
    %246 = vmatprep.subr.bf16.mxu0 0
    %247 = vmatpush2.bf16.msra.mxu0 0
    %248 = vmatprep.subr.bf16.mxu0 0
    %249 = vmatpush2.bf16.msra.mxu0 0
    %250 = vmatprep.subr.bf16.mxu0 0
    %251 = vmatpush2.bf16.msra.mxu0 0
    %252 = vmatprep.subr.bf16.mxu0 0
    %253 = vmatpush2.bf16.msra.mxu0 0
    %254 = vmatprep.subr.bf16.mxu0 0
    %255 = vmatpush2.bf16.msra.mxu0 0
    %256 = vmatprep.subr.bf16.mxu0 0
    %257 = vmatpush2.bf16.msra.mxu0 0
    %258 = vmatprep.subr.bf16.mxu0 0
    %259 = vmatpush2.bf16.msra.mxu0 0
    %260 = vmatprep.mubr.bf16.mxu0 0
    %261 = vmatmul.mubr.bf16.gmra.mxu0 %v216
    %v262 = vpop.f32.mrf.mxu0
    %v263 = vadd.f32 0.0, %v262
    %v264 = vpop.f32.mrf.mxu0
    %v265 = vpop.f32.mrf.mxu0
    %v266 = vadd.f32 0.0, %v265
    %v267 = vpop.f32.mrf.mxu0
    %268 = vmatprep.mubr.bf16.mxu0 0
    %269 = vmatmul.mubr.bf16.gmra.mxu0 %v219
    %v270 = vpop.f32.mrf.mxu0
    %v271 = vadd.f32 0.0, %v270
    %v272 = vpop.f32.mrf.mxu0
    %v273 = vpop.f32.mrf.mxu0
    %v274 = vadd.f32 0.0, %v273
    %v275 = vpop.f32.mrf.mxu0
    %276 = vmatprep.mubr.bf16.mxu0 0
    %277 = vmatmul.mubr.bf16.gmra.mxu0 %v222
    %v278 = vpop.f32.mrf.mxu0
    %v279 = vadd.f32 0.0, %v278
    %v280 = vpop.f32.mrf.mxu0
    %v281 = vpop.f32.mrf.mxu0
    %v282 = vadd.f32 0.0, %v281
    %v283 = vpop.f32.mrf.mxu0
    %284 = vdwg.mxu0
    %v285 = vpack.c.bf16 %v266, %v263
    %v286 = vpack.c.bf16 %v274, %v271
    %v287 = vpack.c.bf16 %v282, %v279
    %v296 = vunpack.c.l.b16 %v55
    %v297 = vunpack.c.l.b16 %v56
    %v298 = vunpack.c.l.b16 %v57
    %v299 = vunpack.c.l.b16 %v58
    %v300 = vunpack.c.l.b16 %v59
    %v301 = vunpack.c.l.b16 %v60
    %v302 = vunpack.c.l.b16 %v61
    %v303 = vunpack.c.l.b16 %v62
    %v304 = vpack.c.b16 %v297, %v296
    %v305 = vpack.c.b16 %v299, %v298
    %v306 = vpack.c.b16 %v301, %v300
    %v307 = vpack.c.b16 %v303, %v302
    %vm312 = vcmask 523264
    %v314 = vsel %vm312, %v285, 0
    %v317 = vsel %vm312, %v286, 0
    %v320 = vsel %vm312, %v287, 0
    %322 = vmatprep.subr.bf16.mxu0 0
    %323 = vmatpush1.bf16.msra.mxu0 0
    %324 = vmatprep.subr.bf16.mxu0 0
    %325 = vmatpush1.bf16.msra.mxu0 0
    %326 = vmatprep.subr.bf16.mxu0 0
    %327 = vmatpush1.bf16.msra.mxu0 0
    %328 = vmatprep.subr.bf16.mxu0 0
    %329 = vmatpush1.bf16.msra.mxu0 0
    %330 = vmatprep.subr.bf16.mxu0 0
    %331 = vmatpush1.bf16.msra.mxu0 %v307
    %332 = vmatprep.subr.bf16.mxu0 0
    %333 = vmatpush1.bf16.msra.mxu0 %v306
    %334 = vmatprep.subr.bf16.mxu0 0
    %335 = vmatpush1.bf16.msra.mxu0 %v305
    %336 = vmatprep.subr.bf16.mxu0 0
    %337 = vmatpush1.bf16.msra.mxu0 %v304
    %338 = vmatprep.subr.bf16.mxu0 0
    %339 = vmatpush2.bf16.msra.mxu0 0
    %340 = vmatprep.subr.bf16.mxu0 0
    %341 = vmatpush2.bf16.msra.mxu0 0
    %342 = vmatprep.subr.bf16.mxu0 0
    %343 = vmatpush2.bf16.msra.mxu0 0
    %344 = vmatprep.subr.bf16.mxu0 0
    %345 = vmatpush2.bf16.msra.mxu0 0
    %346 = vmatprep.subr.bf16.mxu0 0
    %347 = vmatpush2.bf16.msra.mxu0 0
    %348 = vmatprep.subr.bf16.mxu0 0
    %349 = vmatpush2.bf16.msra.mxu0 0
    %350 = vmatprep.subr.bf16.mxu0 0
    %351 = vmatpush2.bf16.msra.mxu0 0
    %352 = vmatprep.subr.bf16.mxu0 0
    %353 = vmatpush2.bf16.msra.mxu0 0
    %354 = vmatprep.mubr.bf16.mxu0 0
    %355 = vmatmul.mubr.bf16.gmra.mxu0 %v314
    %v356 = vpop.f32.mrf.mxu0
    %v357 = vadd.f32 0.0, %v356
    %v358 = vpop.f32.mrf.mxu0
    %v359 = vpop.f32.mrf.mxu0
    %v360 = vadd.f32 0.0, %v359
    %v361 = vpop.f32.mrf.mxu0
    %362 = vmatprep.mubr.bf16.mxu0 0
    %363 = vmatmul.mubr.bf16.gmra.mxu0 %v317
    %v364 = vpop.f32.mrf.mxu0
    %v365 = vadd.f32 0.0, %v364
    %v366 = vpop.f32.mrf.mxu0
    %v367 = vpop.f32.mrf.mxu0
    %v368 = vadd.f32 0.0, %v367
    %v369 = vpop.f32.mrf.mxu0
    %370 = vmatprep.mubr.bf16.mxu0 0
    %371 = vmatmul.mubr.bf16.gmra.mxu0 %v320
    %v372 = vpop.f32.mrf.mxu0
    %v373 = vadd.f32 0.0, %v372
    %v374 = vpop.f32.mrf.mxu0
    %v375 = vpop.f32.mrf.mxu0
    %v376 = vadd.f32 0.0, %v375
    %v377 = vpop.f32.mrf.mxu0
    %378 = vdwg.mxu0
    %v379 = vadd.f32 %v168, %v357
    %v380 = vadd.f32 %v171, %v360
    %v381 = vadd.f32 %v176, %v365
    %v382 = vadd.f32 %v179, %v368
    %v383 = vadd.f32 %v184, %v373
    %v384 = vadd.f32 %v187, %v376
    %v385 = vmax.f32 %v379, 0.0
    %v386 = vmax.f32 %v380, 0.0
    %v387 = vmax.f32 %v381, 0.0
    %v388 = vmax.f32 %v382, 0.0
    %v389 = vmax.f32 %v383, 0.0
    %v390 = vmax.f32 %v384, 0.0
    %v391 = vpack.c.bf16 %v386, %v385
    %v392 = vpack.c.bf16 %v388, %v387
    %v393 = vpack.c.bf16 %v390, %v389
    %v395 = vsel %vm224, %v393, 0
    %397 = vmatprep.subr.bf16.mxu0 0
    %398 = vmatpush1.bf16.msra.mxu0 0
    %399 = vmatprep.subr.bf16.mxu0 0
    %400 = vmatpush1.bf16.msra.mxu0 0
    %401 = vmatprep.subr.bf16.mxu0 0
    %402 = vmatpush1.bf16.msra.mxu0 0
    %403 = vmatprep.subr.bf16.mxu0 0
    %404 = vmatpush1.bf16.msra.mxu0 0
    %405 = vmatprep.subr.bf16.mxu0 0
    %406 = vmatpush1.bf16.msra.mxu0 0
    %407 = vmatprep.subr.bf16.mxu0 0
    %408 = vmatpush1.bf16.msra.mxu0 %v395
    %409 = vmatprep.subr.bf16.mxu0 0
    %410 = vmatpush1.bf16.msra.mxu0 %v392
    %411 = vmatprep.subr.bf16.mxu0 0
    %412 = vmatpush1.bf16.msra.mxu0 %v391
    %413 = vmatprep.subr.bf16.mxu0 0
    %414 = vmatpush2.bf16.msra.mxu0 0
    %415 = vmatprep.subr.bf16.mxu0 0
    %416 = vmatpush2.bf16.msra.mxu0 0
    %417 = vmatprep.subr.bf16.mxu0 0
    %418 = vmatpush2.bf16.msra.mxu0 0
    %419 = vmatprep.subr.bf16.mxu0 0
    %420 = vmatpush2.bf16.msra.mxu0 0
    %421 = vmatprep.subr.bf16.mxu0 0
    %422 = vmatpush2.bf16.msra.mxu0 0
    %423 = vmatprep.subr.bf16.mxu0 0
    %424 = vmatpush2.bf16.msra.mxu0 0
    %425 = vmatprep.subr.bf16.mxu0 0
    %426 = vmatpush2.bf16.msra.mxu0 0
    %427 = vmatprep.subr.bf16.mxu0 0
    %428 = vmatpush2.bf16.msra.mxu0 0
    %429 = vmatprep.mubr.bf16.mxu0 0
    %430 = vmatmul.mubr.bf16.gmra.mxu0 %v216
    %v431 = vpop.f32.mrf.mxu0
    %v432 = vadd.f32 0.0, %v431
    %v433 = vpop.f32.mrf.mxu0
    %v434 = vpop.f32.mrf.mxu0
    %v435 = vadd.f32 0.0, %v434
    %v436 = vpop.f32.mrf.mxu0
    %437 = vmatprep.mubr.bf16.mxu0 0
    %438 = vmatmul.mubr.bf16.gmra.mxu0 %v219
    %v439 = vpop.f32.mrf.mxu0
    %v440 = vadd.f32 0.0, %v439
    %v441 = vpop.f32.mrf.mxu0
    %v442 = vpop.f32.mrf.mxu0
    %v443 = vadd.f32 0.0, %v442
    %v444 = vpop.f32.mrf.mxu0
    %445 = vmatprep.mubr.bf16.mxu0 0
    %446 = vmatmul.mubr.bf16.gmra.mxu0 %v222
    %v447 = vpop.f32.mrf.mxu0
    %v448 = vadd.f32 0.0, %v447
    %v449 = vpop.f32.mrf.mxu0
    %v450 = vpop.f32.mrf.mxu0
    %v451 = vadd.f32 0.0, %v450
    %v452 = vpop.f32.mrf.mxu0
    %453 = vdwg.mxu0
    %v454 = vpack.c.bf16 %v435, %v432
    %v455 = vpack.c.bf16 %v443, %v440
    %v456 = vpack.c.bf16 %v451, %v448
    %v458 = vsel %vm312, %v454, 0
    %v461 = vsel %vm312, %v455, 0
    %v464 = vsel %vm312, %v456, 0
    %466 = vmatprep.subr.bf16.mxu0 0
    %467 = vmatpush1.bf16.msra.mxu0 0
    %468 = vmatprep.subr.bf16.mxu0 0
    %469 = vmatpush1.bf16.msra.mxu0 0
    %470 = vmatprep.subr.bf16.mxu0 0
    %471 = vmatpush1.bf16.msra.mxu0 0
    %472 = vmatprep.subr.bf16.mxu0 0
    %473 = vmatpush1.bf16.msra.mxu0 0
    %474 = vmatprep.subr.bf16.mxu0 0
    %475 = vmatpush1.bf16.msra.mxu0 %v307
    %476 = vmatprep.subr.bf16.mxu0 0
    %477 = vmatpush1.bf16.msra.mxu0 %v306
    %478 = vmatprep.subr.bf16.mxu0 0
    %479 = vmatpush1.bf16.msra.mxu0 %v305
    %480 = vmatprep.subr.bf16.mxu0 0
    %481 = vmatpush1.bf16.msra.mxu0 %v304
    %482 = vmatprep.subr.bf16.mxu0 0
    %483 = vmatpush2.bf16.msra.mxu0 0
    %484 = vmatprep.subr.bf16.mxu0 0
    %485 = vmatpush2.bf16.msra.mxu0 0
    %486 = vmatprep.subr.bf16.mxu0 0
    %487 = vmatpush2.bf16.msra.mxu0 0
    %488 = vmatprep.subr.bf16.mxu0 0
    %489 = vmatpush2.bf16.msra.mxu0 0
    %490 = vmatprep.subr.bf16.mxu0 0
    %491 = vmatpush2.bf16.msra.mxu0 0
    %492 = vmatprep.subr.bf16.mxu0 0
    %493 = vmatpush2.bf16.msra.mxu0 0
    %494 = vmatprep.subr.bf16.mxu0 0
    %495 = vmatpush2.bf16.msra.mxu0 0
    %496 = vmatprep.subr.bf16.mxu0 0
    %497 = vmatpush2.bf16.msra.mxu0 0
    %498 = vmatprep.mubr.bf16.mxu0 0
    %499 = vmatmul.mubr.bf16.gmra.mxu0 %v458
    %v500 = vpop.f32.mrf.mxu0
    %v501 = vadd.f32 0.0, %v500
    %v502 = vpop.f32.mrf.mxu0
    %v503 = vpop.f32.mrf.mxu0
    %v504 = vadd.f32 0.0, %v503
    %v505 = vpop.f32.mrf.mxu0
    %506 = vmatprep.mubr.bf16.mxu0 0
    %507 = vmatmul.mubr.bf16.gmra.mxu0 %v461
    %v508 = vpop.f32.mrf.mxu0
    %v509 = vadd.f32 0.0, %v508
    %v510 = vpop.f32.mrf.mxu0
    %v511 = vpop.f32.mrf.mxu0
    %v512 = vadd.f32 0.0, %v511
    %v513 = vpop.f32.mrf.mxu0
    %514 = vmatprep.mubr.bf16.mxu0 0
    %515 = vmatmul.mubr.bf16.gmra.mxu0 %v464
    %v516 = vpop.f32.mrf.mxu0
    %v517 = vadd.f32 0.0, %v516
    %v518 = vpop.f32.mrf.mxu0
    %v519 = vpop.f32.mrf.mxu0
    %v520 = vadd.f32 0.0, %v519
    %v521 = vpop.f32.mrf.mxu0
    %522 = vdwg.mxu0
    %v523 = vadd.f32 %v168, %v501
    %v524 = vadd.f32 %v171, %v504
    %v525 = vadd.f32 %v176, %v509
    %v526 = vadd.f32 %v179, %v512
    %v527 = vadd.f32 %v184, %v517
    %v528 = vadd.f32 %v187, %v520
    %v529 = vmax.f32 %v523, 0.0
    %v530 = vmax.f32 %v524, 0.0
    %v531 = vmax.f32 %v525, 0.0
    %v532 = vmax.f32 %v526, 0.0
    %v533 = vmax.f32 %v527, 0.0
    %v534 = vmax.f32 %v528, 0.0
    %v535 = vpack.c.bf16 %v530, %v529
    %v536 = vpack.c.bf16 %v532, %v531
    %v537 = vpack.c.bf16 %v534, %v533
    %v541 = vunpack.c.l.b16 %v42
    %v542 = vunpack.c.l.b16 %v43
    %v543 = vunpack.c.l.b16 %v44
    %v544 = vpack.c.b16 %v542, %v541
    %v545 = vpack.c.b16 %v543, %v543
    %v547 = vsel %vm214, %v544, 0
    %v550 = vsel %vm214, %v545, 0
    %v553 = vsel %vm224, %v537, 0
    %555 = vmatprep.subr.bf16.mxu0 0
    %556 = vmatpush1.bf16.msra.mxu0 0
    %557 = vmatprep.subr.bf16.mxu0 0
    %558 = vmatpush1.bf16.msra.mxu0 0
    %559 = vmatprep.subr.bf16.mxu0 0
    %560 = vmatpush1.bf16.msra.mxu0 0
    %561 = vmatprep.subr.bf16.mxu0 0
    %562 = vmatpush1.bf16.msra.mxu0 0
    %563 = vmatprep.subr.bf16.mxu0 0
    %564 = vmatpush1.bf16.msra.mxu0 0
    %565 = vmatprep.subr.bf16.mxu0 0
    %566 = vmatpush1.bf16.msra.mxu0 %v553
    %567 = vmatprep.subr.bf16.mxu0 0
    %568 = vmatpush1.bf16.msra.mxu0 %v536
    %569 = vmatprep.subr.bf16.mxu0 0
    %570 = vmatpush1.bf16.msra.mxu0 %v535
    %571 = vmatprep.subr.bf16.mxu0 0
    %572 = vmatpush2.bf16.msra.mxu0 0
    %573 = vmatprep.subr.bf16.mxu0 0
    %574 = vmatpush2.bf16.msra.mxu0 0
    %575 = vmatprep.subr.bf16.mxu0 0
    %576 = vmatpush2.bf16.msra.mxu0 0
    %577 = vmatprep.subr.bf16.mxu0 0
    %578 = vmatpush2.bf16.msra.mxu0 0
    %579 = vmatprep.subr.bf16.mxu0 0
    %580 = vmatpush2.bf16.msra.mxu0 0
    %581 = vmatprep.subr.bf16.mxu0 0
    %582 = vmatpush2.bf16.msra.mxu0 0
    %583 = vmatprep.subr.bf16.mxu0 0
    %584 = vmatpush2.bf16.msra.mxu0 0
    %585 = vmatprep.subr.bf16.mxu0 0
    %586 = vmatpush2.bf16.msra.mxu0 0
    %587 = vmatprep.mubr.bf16.mxu0 0
    %588 = vmatmul.mubr.bf16.gmra.mxu0 %v547
    %v589 = vpop.f32.mrf.mxu0
    %v590 = vadd.f32 0.0, %v589
    %v591 = vpop.f32.mrf.mxu0
    %v592 = vpop.f32.mrf.mxu0
    %v593 = vadd.f32 0.0, %v592
    %v594 = vpop.f32.mrf.mxu0
    %595 = vmatprep.mubr.bf16.mxu0 0
    %596 = vmatmul.mubr.bf16.gmra.mxu0 %v550
    %v597 = vpop.f32.mrf.mxu0
    %v598 = vadd.f32 0.0, %v597
    %v599 = vpop.f32.mrf.mxu0
    %v600 = vpop.f32.mrf.mxu0
    %v601 = vpop.f32.mrf.mxu0
    %602 = vdwg.mxu0
    %v603 = vpack.c.bf16 %v593, %v590
    %v604 = vpack.c.bf16 %v598, %v598
    %v613 = vunpack.c.l.b16 %v68
    %v614 = vunpack.c.l.b16 %v69
    %v615 = vunpack.c.l.b16 %v70
    %v616 = vunpack.c.l.b16 %v71
    %v617 = vunpack.c.l.b16 %v72
    %v618 = vunpack.c.l.b16 %v73
    %v619 = vunpack.c.l.b16 %v74
    %v620 = vunpack.c.l.b16 %v75
    %v621 = vpack.c.b16 %v614, %v613
    %v622 = vpack.c.b16 %v616, %v615
    %v623 = vpack.c.b16 %v618, %v617
    %v624 = vpack.c.b16 %v620, %v619
    %v630 = vsel %vm312, %v603, 0
    %v633 = vsel %vm312, %v604, 0
    %635 = vmatprep.subr.bf16.mxu0 0
    %636 = vmatpush1.bf16.msra.mxu0 0
    %637 = vmatprep.subr.bf16.mxu0 0
    %638 = vmatpush1.bf16.msra.mxu0 0
    %639 = vmatprep.subr.bf16.mxu0 0
    %640 = vmatpush1.bf16.msra.mxu0 0
    %641 = vmatprep.subr.bf16.mxu0 0
    %642 = vmatpush1.bf16.msra.mxu0 0
    %643 = vmatprep.subr.bf16.mxu0 0
    %644 = vmatpush1.bf16.msra.mxu0 %v624
    %645 = vmatprep.subr.bf16.mxu0 0
    %646 = vmatpush1.bf16.msra.mxu0 %v623
    %647 = vmatprep.subr.bf16.mxu0 0
    %648 = vmatpush1.bf16.msra.mxu0 %v622
    %649 = vmatprep.subr.bf16.mxu0 0
    %650 = vmatpush1.bf16.msra.mxu0 %v621
    %651 = vmatprep.subr.bf16.mxu0 0
    %652 = vmatpush2.bf16.msra.mxu0 0
    %653 = vmatprep.subr.bf16.mxu0 0
    %654 = vmatpush2.bf16.msra.mxu0 0
    %655 = vmatprep.subr.bf16.mxu0 0
    %656 = vmatpush2.bf16.msra.mxu0 0
    %657 = vmatprep.subr.bf16.mxu0 0
    %658 = vmatpush2.bf16.msra.mxu0 0
    %659 = vmatprep.subr.bf16.mxu0 0
    %660 = vmatpush2.bf16.msra.mxu0 0
    %661 = vmatprep.subr.bf16.mxu0 0
    %662 = vmatpush2.bf16.msra.mxu0 0
    %663 = vmatprep.subr.bf16.mxu0 0
    %664 = vmatpush2.bf16.msra.mxu0 0
    %665 = vmatprep.subr.bf16.mxu0 0
    %666 = vmatpush2.bf16.msra.mxu0 0
    %667 = vmatprep.mubr.bf16.mxu0 0
    %668 = vmatmul.mubr.bf16.gmra.mxu0 %v630
    %v669 = vpop.f32.mrf.mxu0
    %v670 = vadd.f32 0.0, %v669
    %v671 = vpop.f32.mrf.mxu0
    %v672 = vpop.f32.mrf.mxu0
    %v673 = vadd.f32 0.0, %v672
    %v674 = vpop.f32.mrf.mxu0
    %675 = vmatprep.mubr.bf16.mxu0 0
    %676 = vmatmul.mubr.bf16.gmra.mxu0 %v633
    %v677 = vpop.f32.mrf.mxu0
    %v678 = vadd.f32 0.0, %v677
    %v679 = vpop.f32.mrf.mxu0
    %v680 = vpop.f32.mrf.mxu0
    %v681 = vpop.f32.mrf.mxu0
    %682 = vdwg.mxu0
    %v686 = vunpack.c.l.b16 %v45
    %v687 = vunpack.c.l.b16 %v46
    %v688 = vunpack.c.l.b16 %v47
    %v689 = vpack.c.b16 %v687, %v686
    %v690 = vpack.c.b16 %v688, %v688
    %v696 = vunpack.c.l.b16 %v63
    %v697 = vunpack.c.l.b16 %v64
    %v698 = vunpack.c.l.b16 %v65
    %v699 = vunpack.c.l.b16 %v66
    %v700 = vunpack.c.l.b16 %v67
    %v701 = vpack.c.b16 %v697, %v696
    %v702 = vpack.c.b16 %v699, %v698
    %v703 = vpack.c.b16 %v700, %v700
    %vm706 = vcmask 277504
    %v708 = vsel %vm706, %v689, 0
    %v711 = vsel %vm706, %v690, 0
    %vm713 = vcmask 1040384
    %v715 = vsel %vm713, %v703, 0
    %717 = vmatprep.subr.bf16.mxu0 0
    %718 = vmatpush1.bf16.msra.mxu0 0
    %719 = vmatprep.subr.bf16.mxu0 0
    %720 = vmatpush1.bf16.msra.mxu0 0
    %721 = vmatprep.subr.bf16.mxu0 0
    %722 = vmatpush1.bf16.msra.mxu0 0
    %723 = vmatprep.subr.bf16.mxu0 0
    %724 = vmatpush1.bf16.msra.mxu0 0
    %725 = vmatprep.subr.bf16.mxu0 0
    %726 = vmatpush1.bf16.msra.mxu0 0
    %727 = vmatprep.subr.bf16.mxu0 0
    %728 = vmatpush1.bf16.msra.mxu0 %v715
    %729 = vmatprep.subr.bf16.mxu0 0
    %730 = vmatpush1.bf16.msra.mxu0 %v702
    %731 = vmatprep.subr.bf16.mxu0 0
    %732 = vmatpush1.bf16.msra.mxu0 %v701
    %733 = vmatprep.subr.bf16.mxu0 0
    %734 = vmatpush2.bf16.msra.mxu0 0
    %735 = vmatprep.subr.bf16.mxu0 0
    %736 = vmatpush2.bf16.msra.mxu0 0
    %737 = vmatprep.subr.bf16.mxu0 0
    %738 = vmatpush2.bf16.msra.mxu0 0
    %739 = vmatprep.subr.bf16.mxu0 0
    %740 = vmatpush2.bf16.msra.mxu0 0
    %741 = vmatprep.subr.bf16.mxu0 0
    %742 = vmatpush2.bf16.msra.mxu0 0
    %743 = vmatprep.subr.bf16.mxu0 0
    %744 = vmatpush2.bf16.msra.mxu0 0
    %745 = vmatprep.subr.bf16.mxu0 0
    %746 = vmatpush2.bf16.msra.mxu0 0
    %747 = vmatprep.subr.bf16.mxu0 0
    %748 = vmatpush2.bf16.msra.mxu0 0
    %749 = vmatprep.mubr.bf16.mxu0 0
    %750 = vmatmul.mubr.bf16.gmra.mxu0 %v708
    %v751 = vpop.f32.mrf.mxu0
    %v752 = vadd.f32 %v670, %v751
    %v753 = vpop.f32.mrf.mxu0
    %v754 = vpop.f32.mrf.mxu0
    %v755 = vadd.f32 %v673, %v754
    %v756 = vpop.f32.mrf.mxu0
    %757 = vmatprep.mubr.bf16.mxu0 0
    %758 = vmatmul.mubr.bf16.gmra.mxu0 %v711
    %v759 = vpop.f32.mrf.mxu0
    %v760 = vadd.f32 %v678, %v759
    %v761 = vpop.f32.mrf.mxu0
    %v762 = vpop.f32.mrf.mxu0
    %v763 = vpop.f32.mrf.mxu0
    %764 = vdwg.mxu0
    %v765 = vmax.f32 %v752, 0.0
    %v766 = vmax.f32 %v755, 0.0
    %v767 = vmax.f32 %v760, 0.0
    %v768 = vpack.c.bf16 %v766, %v765
    %v769 = vpack.c.bf16 %v767, %v767
    %vm770 = vcmask 179200
    %v772 = vsel %vm770, %v48, 0
    %vm774 = vcmask 1042432
    %v776 = vsel %vm774, %v769, 0
    %778 = vmatprep.subr.bf16.mxu0 0
    %779 = vmatpush1.bf16.msra.mxu0 0
    %780 = vmatprep.subr.bf16.mxu0 0
    %781 = vmatpush1.bf16.msra.mxu0 0
    %782 = vmatprep.subr.bf16.mxu0 0
    %783 = vmatpush1.bf16.msra.mxu0 0
    %784 = vmatprep.subr.bf16.mxu0 0
    %785 = vmatpush1.bf16.msra.mxu0 0
    %786 = vmatprep.subr.bf16.mxu0 0
    %787 = vmatpush1.bf16.msra.mxu0 0
    %788 = vmatprep.subr.bf16.mxu0 0
    %789 = vmatpush1.bf16.msra.mxu0 0
    %790 = vmatprep.subr.bf16.mxu0 0
    %791 = vmatpush1.bf16.msra.mxu0 %v776
    %792 = vmatprep.subr.bf16.mxu0 0
    %793 = vmatpush1.bf16.msra.mxu0 %v768
    %794 = vmatprep.subr.bf16.mxu0 0
    %795 = vmatpush2.bf16.msra.mxu0 0
    %796 = vmatprep.subr.bf16.mxu0 0
    %797 = vmatpush2.bf16.msra.mxu0 0
    %798 = vmatprep.subr.bf16.mxu0 0
    %799 = vmatpush2.bf16.msra.mxu0 0
    %800 = vmatprep.subr.bf16.mxu0 0
    %801 = vmatpush2.bf16.msra.mxu0 0
    %802 = vmatprep.subr.bf16.mxu0 0
    %803 = vmatpush2.bf16.msra.mxu0 0
    %804 = vmatprep.subr.bf16.mxu0 0
    %805 = vmatpush2.bf16.msra.mxu0 0
    %806 = vmatprep.subr.bf16.mxu0 0
    %807 = vmatpush2.bf16.msra.mxu0 0
    %808 = vmatprep.subr.bf16.mxu0 0
    %809 = vmatpush2.bf16.msra.mxu0 0
    %810 = vmatprep.mubr.bf16.mxu0 0
    %811 = vmatmul.mubr.bf16.gmra.mxu0 %v772
    %v812 = vpop.f32.mrf.mxu0
    %v813 = vadd.f32 0.0, %v812
    %v814 = vpop.f32.mrf.mxu0
    %v815 = vpop.f32.mrf.mxu0
    %v816 = vpop.f32.mrf.mxu0
    %817 = vdwg.mxu0
    %v818 = vpack.c.bf16 %v813, %v813
    %v819 = vlaneseq
    %v820 = vshrl.u32 %v819, 7
    %v821 = vsub.s32 0, %v820
    %v822 = vrot.slane %v88, %v821
    %v831 = vunpack.c.l.b16 %v76
    %v832 = vunpack.c.l.b16 %v77
    %v833 = vunpack.c.l.b16 %v78
    %v834 = vunpack.c.l.b16 %v79
    %v835 = vunpack.c.l.b16 %v80
    %v836 = vunpack.c.l.b16 %v81
    %v837 = vunpack.c.l.b16 %v82
    %v838 = vunpack.c.l.b16 %v83
    %v839 = vpack.c.b16 %v832, %v831
    %v840 = vpack.c.b16 %v834, %v833
    %v841 = vpack.c.b16 %v836, %v835
    %v842 = vpack.c.b16 %v838, %v837
    %v848 = vsel %vm312, %v818, 0
    %850 = vmatprep.subr.bf16.mxu0 0
    %851 = vmatpush1.bf16.msra.mxu0 0
    %852 = vmatprep.subr.bf16.mxu0 0
    %853 = vmatpush1.bf16.msra.mxu0 0
    %854 = vmatprep.subr.bf16.mxu0 0
    %855 = vmatpush1.bf16.msra.mxu0 0
    %856 = vmatprep.subr.bf16.mxu0 0
    %857 = vmatpush1.bf16.msra.mxu0 0
    %858 = vmatprep.subr.bf16.mxu0 0
    %859 = vmatpush1.bf16.msra.mxu0 %v842
    %860 = vmatprep.subr.bf16.mxu0 0
    %861 = vmatpush1.bf16.msra.mxu0 %v841
    %862 = vmatprep.subr.bf16.mxu0 0
    %863 = vmatpush1.bf16.msra.mxu0 %v840
    %864 = vmatprep.subr.bf16.mxu0 0
    %865 = vmatpush1.bf16.msra.mxu0 %v839
    %866 = vmatprep.subr.bf16.mxu0 0
    %867 = vmatpush2.bf16.msra.mxu0 0
    %868 = vmatprep.subr.bf16.mxu0 0
    %869 = vmatpush2.bf16.msra.mxu0 0
    %870 = vmatprep.subr.bf16.mxu0 0
    %871 = vmatpush2.bf16.msra.mxu0 0
    %872 = vmatprep.subr.bf16.mxu0 0
    %873 = vmatpush2.bf16.msra.mxu0 0
    %874 = vmatprep.subr.bf16.mxu0 0
    %875 = vmatpush2.bf16.msra.mxu0 0
    %876 = vmatprep.subr.bf16.mxu0 0
    %877 = vmatpush2.bf16.msra.mxu0 0
    %878 = vmatprep.subr.bf16.mxu0 0
    %879 = vmatpush2.bf16.msra.mxu0 0
    %880 = vmatprep.subr.bf16.mxu0 0
    %881 = vmatpush2.bf16.msra.mxu0 0
    %882 = vmatprep.mubr.bf16.mxu0 0
    %883 = vmatmul.mubr.bf16.gmra.mxu0 %v848
    %v884 = vpop.f32.mrf.mxu0
    %v885 = vadd.f32 %v822, %v884
    %v886 = vpop.f32.mrf.mxu0
    %v887 = vpop.f32.mrf.mxu0
    %v888 = vpop.f32.mrf.mxu0
    %889 = vdwg.mxu0
    %v890 = vmax.f32 %v885, 0.0
    %v891 = vpack.c.bf16 %v890, %v890
    %v892 = vlaneseq
    %v893 = vshrl.u32 %v892, 7
    %v894 = vsub.s32 0, %v893
    %v895 = vrot.slane %v89, %v894
    %v900 = vunpack.c.l.b16 %v84
    %v901 = vunpack.c.l.b16 %v85
    %v902 = vunpack.c.l.b16 %v86
    %v903 = vunpack.c.l.b16 %v87
    %v904 = vpack.c.b16 %v901, %v900
    %v905 = vpack.c.b16 %v903, %v902
    %vm908 = vcmask 261120
    %v910 = vsel %vm908, %v891, 0
    %912 = vmatprep.subr.bf16.mxu0 0
    %913 = vmatpush1.bf16.msra.mxu0 0
    %914 = vmatprep.subr.bf16.mxu0 0
    %915 = vmatpush1.bf16.msra.mxu0 0
    %916 = vmatprep.subr.bf16.mxu0 0
    %917 = vmatpush1.bf16.msra.mxu0 0
    %918 = vmatprep.subr.bf16.mxu0 0
    %919 = vmatpush1.bf16.msra.mxu0 0
    %920 = vmatprep.subr.bf16.mxu0 0
    %921 = vmatpush1.bf16.msra.mxu0 0
    %922 = vmatprep.subr.bf16.mxu0 0
    %923 = vmatpush1.bf16.msra.mxu0 0
    %924 = vmatprep.subr.bf16.mxu0 0
    %925 = vmatpush1.bf16.msra.mxu0 %v905
    %926 = vmatprep.subr.bf16.mxu0 0
    %927 = vmatpush1.bf16.msra.mxu0 %v904
    %928 = vmatprep.subr.bf16.mxu0 0
    %929 = vmatpush2.bf16.msra.mxu0 0
    %930 = vmatprep.subr.bf16.mxu0 0
    %931 = vmatpush2.bf16.msra.mxu0 0
    %932 = vmatprep.subr.bf16.mxu0 0
    %933 = vmatpush2.bf16.msra.mxu0 0
    %934 = vmatprep.subr.bf16.mxu0 0
    %935 = vmatpush2.bf16.msra.mxu0 0
    %936 = vmatprep.subr.bf16.mxu0 0
    %937 = vmatpush2.bf16.msra.mxu0 0
    %938 = vmatprep.subr.bf16.mxu0 0
    %939 = vmatpush2.bf16.msra.mxu0 0
    %940 = vmatprep.subr.bf16.mxu0 0
    %941 = vmatpush2.bf16.msra.mxu0 0
    %942 = vmatprep.subr.bf16.mxu0 0
    %943 = vmatpush2.bf16.msra.mxu0 0
    %944 = vmatprep.mubr.bf16.mxu0 0
    %945 = vmatmul.mubr.bf16.gmra.mxu0 %v910
    %v946 = vpop.f32.mrf.mxu0
    %v947 = vadd.f32 %v895, %v946
    %v948 = vpop.f32.mrf.mxu0
    %v949 = vpop.f32.mrf.mxu0
    %v950 = vpop.f32.mrf.mxu0
    %951 = vdwg.mxu0
    %952 = vst [vmem:[#allocation5] sm:$0xff] %v947
    // Predicated region
    $region18: #{tpu_custom_call.1} parent=1 // pred_check
      _
    $region19: #{tpu_custom_call.1} parent=1 // pred_check_branch
      %954 = sbr.rel (0) target = $region21
    $region20: #{tpu_custom_call.1} parent=1 // pred_region
      %s956 = ssub.s32 128, 128
      %957 = vsyncadd [#allocation4], %s956
      %s959 = sshll.u32 [#allocation5], 4
      %s960 = int_to_ptr.vmem [resolvable:$true] %s959
      %962 = dma.vmem_to_hbm [thread:$0]  %s960, 128, %s3, [#allocation4]
    $region21: #{tpu_custom_call.1} parent=1 // pred_fallthru
      _
    // Predicated region
    $region22: #{tpu_custom_call.1} parent=1 // pred_check
      _
    $region23: #{tpu_custom_call.1} parent=1 // pred_check_branch
      %964 = sbr.rel (0) target = $region25
    $region24: #{tpu_custom_call.1} parent=1 // pred_region
      %965 = dma.done [#allocation4], 128
    $region25: #{tpu_custom_call.1} parent=1 // pred_fallthru
      _
    %966 = vsyncpa [#allocation3], 1
    %967 = vsyncpa [#allocation4], 1

</llo_original>
